<compile_context>
chip_gen: v6e
topology: v6e:2x2x1
jax: 0.10.0
libtpu: 0.0.40
codegen_flags: <defaults>
</compile_context>

<pallas_src>
import functools

import jax
import jax.numpy as jnp
import numpy as np
from jax import lax
from jax.experimental import pallas as pl
from jax.experimental.pallas import tpu as pltpu

MIN_VALUE = 0.77
MAX_VALUE = 0.8


def _conv_avgpool_clamp_kernel(x_ref, wb_ref, o_ref, canvas, *,
                               min_value, max_value):
    # x_ref : (N, C, H, W)      VMEM  -- unpadded input
    # wb_ref: (C*C + C,)        SMEM  -- [w row-major (o*C + c), then bias]
    # o_ref : (N, C, H+2, W+2)  VMEM
    # canvas: (N, H+4, W+4)     VMEM scratch -- zero-padded per-channel plane
    N, C, H, W = x_ref.shape
    Hp4, Wp4 = H + 4, W + 4
    Ho, Wo = H + 2, W + 2

    # Hoist all scalar parameter reads (SMEM) out of the compute.
    w = [[wb_ref[o * C + c] for c in range(C)] for o in range(C)]
    b = [wb_ref[C * C + o] for o in range(C)]

    # Zero the canvas once; the 2-px border (conv pad + pool pad) stays zero
    # for every output channel, only the interior is rewritten per channel.
    canvas[...] = jnp.zeros_like(canvas)

    # Pooled bias contribution.  The conv bias covers the 1-px-inset region of
    # the canvas (the conv output incl. its padded border); pooling is linear,
    # so its contribution to each 3x3 window-sum is b[o] * K with K the count
    # of conv-output pixels per window.  Computed once, shared by channels.
    ri = lax.broadcasted_iota(jnp.int32, (Hp4, Wp4), 0)
    ci = lax.broadcasted_iota(jnp.int32, (Hp4, Wp4), 1)
    bias_mask = jnp.where(
        (ri >= 1) & (ri <= Hp4 - 2) & (ci >= 1) & (ci <= Wp4 - 2),
        jnp.float32(1.0), jnp.float32(0.0))                          # (Hp4, Wp4)
    hK = bias_mask[:, 0:Wo] + bias_mask[:, 1:1 + Wo] + bias_mask[:, 2:2 + Wo]
    K = hK[0:Ho, :] + hK[1:1 + Ho, :] + hK[2:2 + Ho, :]              # (Ho, Wo)

    inv9 = jnp.float32(1.0 / 9.0)

    for o in range(C):
        # 1x1 conv channel mix on the unpadded input (VPU scalar-splat FMAs,
        # fully unrolled; channels read at the point of use).
        m = w[o][0] * x_ref[:, 0]
        for c in range(1, C):
            m = m + w[o][c] * x_ref[:, c]                            # (N, H, W)

        # Place the mixed plane into the zeroed canvas interior.
        canvas[:, 2:2 + H, 2:2 + W] = m
        p = canvas[...]                                              # (N, Hp4, Wp4)

        # Separable 3x3 sum pool, stride 1 (count_include_pad => /9 below).
        h = p[:, :, 0:Wo] + p[:, :, 1:1 + Wo] + p[:, :, 2:2 + Wo]    # (N, Hp4, Wo)
        v = h[:, 0:Ho, :] + h[:, 1:1 + Ho, :] + h[:, 2:2 + Ho, :]    # (N, Ho, Wo)

        y = jnp.clip((v + b[o] * K) * inv9, min_value, max_value)
        o_ref[:, o, :, :] = y.astype(o_ref.dtype)


def pack_params(w, b):
    """Merge the (C, C) 1x1-conv weight and (C,) bias into one flat operand."""
    return jnp.concatenate([jnp.asarray(w, jnp.float32).reshape(-1),
                            jnp.asarray(b, jnp.float32).reshape(-1)])


@functools.partial(jax.jit, static_argnames=("min_value", "max_value"))
def model_forward(x, wb, min_value=MIN_VALUE, max_value=MAX_VALUE):
    """x: (N, C, H, W) f32; wb: (C*C + C,) f32 packed conv weight + bias."""
    N, C, H, W = x.shape
    Ho, Wo = H + 2, W + 2

    kernel = functools.partial(_conv_avgpool_clamp_kernel,
                               min_value=float(min_value),
                               max_value=float(max_value))

    # Single invocation (no grid): the whole tensor is a few KB, so it fits
    # VMEM trivially on v5e/v6e/v7x and avoids per-grid-step overhead.
    return pl.pallas_call(
        kernel,
        out_shape=jax.ShapeDtypeStruct((N, C, Ho, Wo), jnp.float32),
        in_specs=[
            pl.BlockSpec(memory_space=pltpu.MemorySpace.VMEM),
            pl.BlockSpec(memory_space=pltpu.MemorySpace.SMEM),
        ],
        out_specs=pl.BlockSpec(memory_space=pltpu.MemorySpace.VMEM),
        scratch_shapes=[pltpu.VMEM((N, H + 4, W + 4), jnp.float32)],
    )(x.astype(jnp.float32), wb)


def reference(x, w, b, min_value=MIN_VALUE, max_value=MAX_VALUE):
    """Pure-JAX reference matching PyTorch semantics."""
    N, C, H, W = x.shape
    Ho, Wo = H + 2, W + 2
    xp = jnp.pad(x, ((0, 0), (0, 0), (1, 1), (1, 1)))
    conv = jnp.einsum('oc,nchw->nohw', w, xp) + b[None, :, None, None]
    cp = jnp.pad(conv, ((0, 0), (0, 0), (1, 1), (1, 1)))
    s = jnp.zeros_like(conv)
    for di in range(3):
        for dj in range(3):
            s = s + cp[:, :, di:di + Ho, dj:dj + Wo]
    y = s / 9.0
    return jnp.clip(y, min_value, max_value)


if __name__ == "__main__":
    key = jax.random.PRNGKey(0)
    kx, kw, kb = jax.random.split(key, 3)

    N, C, H, W = 2, 3, 16, 16
    x = jax.random.normal(kx, (N, C, H, W), dtype=jnp.float32)

    # Deterministic "Conv2d(3, 3, 1)" parameters: weight (Cout, Cin) squeezed
    # from (Cout, Cin, 1, 1), bias (Cout,).
    fan_in = C  # Cin * 1 * 1
    bound = 1.0 / np.sqrt(fan_in)
    w = jax.random.uniform(kw, (C, C), jnp.float32, -bound, bound)
    b = jax.random.uniform(kb, (C,), jnp.float32, -bound, bound)

    wb = pack_params(w, b)
    out = jax.block_until_ready(model_forward(x, wb))

    ref = reference(x, w, b)
    assert out.shape == (N, C, H + 2, W + 2), out.shape
    np.testing.assert_allclose(np.asarray(out), np.asarray(ref),
                               rtol=1e-5, atol=1e-5)

    print("KERNEL_OK")
</pallas_src>

<mosaic_0001>
module attributes {stable_mosaic.version = 11 : i64} {
  func.func @_conv_avgpool_clamp_kernel(%arg0: memref<2x3x16x16xf32, #tpu.memory_space<vmem>>, %arg1: memref<12xf32, #tpu.memory_space<smem>>, %arg2: memref<2x3x18x18xf32, #tpu.memory_space<vmem>>, %arg3: memref<2x20x20xf32, #tpu.memory_space<vmem>>) attributes {dimension_semantics = [], scalar_prefetch = 0 : i64, scratch_operands = 1 : i64, tpu.core_type = #tpu.core_type<tc>} {
    %c0 = arith.constant 0 : index
    %0 = memref.load %arg1[%c0] : memref<12xf32, #tpu.memory_space<smem>>
    %c1 = arith.constant 1 : index
    %1 = memref.load %arg1[%c1] : memref<12xf32, #tpu.memory_space<smem>>
    %c2 = arith.constant 2 : index
    %2 = memref.load %arg1[%c2] : memref<12xf32, #tpu.memory_space<smem>>
    %c3 = arith.constant 3 : index
    %3 = memref.load %arg1[%c3] : memref<12xf32, #tpu.memory_space<smem>>
    %c4 = arith.constant 4 : index
    %4 = memref.load %arg1[%c4] : memref<12xf32, #tpu.memory_space<smem>>
    %c5 = arith.constant 5 : index
    %5 = memref.load %arg1[%c5] : memref<12xf32, #tpu.memory_space<smem>>
    %c6 = arith.constant 6 : index
    %6 = memref.load %arg1[%c6] : memref<12xf32, #tpu.memory_space<smem>>
    %c7 = arith.constant 7 : index
    %7 = memref.load %arg1[%c7] : memref<12xf32, #tpu.memory_space<smem>>
    %c8 = arith.constant 8 : index
    %8 = memref.load %arg1[%c8] : memref<12xf32, #tpu.memory_space<smem>>
    %c9 = arith.constant 9 : index
    %9 = memref.load %arg1[%c9] : memref<12xf32, #tpu.memory_space<smem>>
    %c10 = arith.constant 10 : index
    %10 = memref.load %arg1[%c10] : memref<12xf32, #tpu.memory_space<smem>>
    %c11 = arith.constant 11 : index
    %11 = memref.load %arg1[%c11] : memref<12xf32, #tpu.memory_space<smem>>
    %cst = arith.constant 0.000000e+00 : f32
    %12 = vector.broadcast %cst : f32 to vector<2x20x20xf32>
    %c0_0 = arith.constant 0 : index
    %c0_1 = arith.constant 0 : index
    %c0_2 = arith.constant 0 : index
    %13 = vector.load %arg3[%c0_0, %c0_1, %c0_2] : memref<2x20x20xf32, #tpu.memory_space<vmem>>, vector<2x20x20xf32>
    tpu.vector_store %arg3[%c0_0, %c0_1, %c0_2], %12 {strides = array<i32>} : memref<2x20x20xf32, #tpu.memory_space<vmem>>, vector<2x20x20xf32>,
    %14 = tpu.iota {dimensions = array<i32: 0>} : vector<20x20xi32>
    %15 = tpu.iota {dimensions = array<i32: 1>} : vector<20x20xi32>
    %c1_i32 = arith.constant 1 : i32
    %16 = vector.broadcast %c1_i32 : i32 to vector<20x20xi32>
    %17 = arith.cmpi sge, %14, %16 : vector<20x20xi32>
    %c18_i32 = arith.constant 18 : i32
    %18 = vector.broadcast %c18_i32 : i32 to vector<20x20xi32>
    %19 = arith.cmpi sle, %14, %18 : vector<20x20xi32>
    %20 = arith.andi %17, %19 : vector<20x20xi1>
    %c1_i32_3 = arith.constant 1 : i32
    %21 = vector.broadcast %c1_i32_3 : i32 to vector<20x20xi32>
    %22 = arith.cmpi sge, %15, %21 : vector<20x20xi32>
    %23 = arith.andi %20, %22 : vector<20x20xi1>
    %c18_i32_4 = arith.constant 18 : i32
    %24 = vector.broadcast %c18_i32_4 : i32 to vector<20x20xi32>
    %25 = arith.cmpi sle, %15, %24 : vector<20x20xi32>
    %26 = arith.andi %23, %25 : vector<20x20xi1>
    %cst_5 = arith.constant 1.000000e+00 : f32
    %cst_6 = arith.constant 0.000000e+00 : f32
    %27 = vector.broadcast %cst_5 : f32 to vector<20x20xf32>
    %28 = vector.broadcast %cst_6 : f32 to vector<20x20xf32>
    %29 = arith.select %26, %27, %28 : vector<20x20xi1>, vector<20x20xf32>
    %30 = vector.extract_strided_slice %29 {offsets = [0, 0], sizes = [20, 18], strides = [1, 1]} : vector<20x20xf32> to vector<20x18xf32>
    %31 = vector.extract_strided_slice %29 {offsets = [0, 1], sizes = [20, 18], strides = [1, 1]} : vector<20x20xf32> to vector<20x18xf32>
    %32 = arith.addf %30, %31 : vector<20x18xf32>
    %33 = vector.extract_strided_slice %29 {offsets = [0, 2], sizes = [20, 18], strides = [1, 1]} : vector<20x20xf32> to vector<20x18xf32>
    %34 = arith.addf %32, %33 : vector<20x18xf32>
    %35 = vector.extract_strided_slice %34 {offsets = [0, 0], sizes = [18, 18], strides = [1, 1]} : vector<20x18xf32> to vector<18x18xf32>
    %36 = vector.extract_strided_slice %34 {offsets = [1, 0], sizes = [18, 18], strides = [1, 1]} : vector<20x18xf32> to vector<18x18xf32>
    %37 = arith.addf %35, %36 : vector<18x18xf32>
    %38 = vector.extract_strided_slice %34 {offsets = [2, 0], sizes = [18, 18], strides = [1, 1]} : vector<20x18xf32> to vector<18x18xf32>
    %39 = arith.addf %37, %38 : vector<18x18xf32>
    %c0_7 = arith.constant 0 : index
    %c0_8 = arith.constant 0 : index
    %c0_9 = arith.constant 0 : index
    %c0_10 = arith.constant 0 : index
    %40 = vector.load %arg0[%c0_7, %c0_8, %c0_9, %c0_10] : memref<2x3x16x16xf32, #tpu.memory_space<vmem>>, vector<2x1x16x16xf32>
    %41 = vector.shape_cast %40 : vector<2x1x16x16xf32> to vector<2x16x16xf32>
    %42 = vector.broadcast %0 : f32 to vector<2x16x16xf32>
    %43 = arith.mulf %42, %41 : vector<2x16x16xf32>
    %c0_11 = arith.constant 0 : index
    %c1_12 = arith.constant 1 : index
    %c0_13 = arith.constant 0 : index
    %c0_14 = arith.constant 0 : index
    %44 = vector.load %arg0[%c0_11, %c1_12, %c0_13, %c0_14] : memref<2x3x16x16xf32, #tpu.memory_space<vmem>>, vector<2x1x16x16xf32>
    %45 = vector.shape_cast %44 : vector<2x1x16x16xf32> to vector<2x16x16xf32>
    %46 = vector.broadcast %1 : f32 to vector<2x16x16xf32>
    %47 = arith.mulf %46, %45 : vector<2x16x16xf32>
    %48 = arith.addf %43, %47 : vector<2x16x16xf32>
    %c0_15 = arith.constant 0 : index
    %c2_16 = arith.constant 2 : index
    %c0_17 = arith.constant 0 : index
    %c0_18 = arith.constant 0 : index
    %49 = vector.load %arg0[%c0_15, %c2_16, %c0_17, %c0_18] : memref<2x3x16x16xf32, #tpu.memory_space<vmem>>, vector<2x1x16x16xf32>
    %50 = vector.shape_cast %49 : vector<2x1x16x16xf32> to vector<2x16x16xf32>
    %51 = vector.broadcast %2 : f32 to vector<2x16x16xf32>
    %52 = arith.mulf %51, %50 : vector<2x16x16xf32>
    %53 = arith.addf %48, %52 : vector<2x16x16xf32>
    %c0_19 = arith.constant 0 : index
    %c2_20 = arith.constant 2 : index
    %c2_21 = arith.constant 2 : index
    %54 = vector.load %arg3[%c0_19, %c2_20, %c2_21] : memref<2x20x20xf32, #tpu.memory_space<vmem>>, vector<2x16x16xf32>
    tpu.vector_store %arg3[%c0_19, %c2_20, %c2_21], %53 {strides = array<i32>} : memref<2x20x20xf32, #tpu.memory_space<vmem>>, vector<2x16x16xf32>,
    %c0_22 = arith.constant 0 : index
    %c0_23 = arith.constant 0 : index
    %c0_24 = arith.constant 0 : index
    %55 = vector.load %arg3[%c0_22, %c0_23, %c0_24] : memref<2x20x20xf32, #tpu.memory_space<vmem>>, vector<2x20x20xf32>
    %56 = vector.extract_strided_slice %55 {offsets = [0, 0, 0], sizes = [2, 20, 18], strides = [1, 1, 1]} : vector<2x20x20xf32> to vector<2x20x18xf32>
    %57 = vector.extract_strided_slice %55 {offsets = [0, 0, 1], sizes = [2, 20, 18], strides = [1, 1, 1]} : vector<2x20x20xf32> to vector<2x20x18xf32>
    %58 = arith.addf %56, %57 : vector<2x20x18xf32>
    %59 = vector.extract_strided_slice %55 {offsets = [0, 0, 2], sizes = [2, 20, 18], strides = [1, 1, 1]} : vector<2x20x20xf32> to vector<2x20x18xf32>
    %60 = arith.addf %58, %59 : vector<2x20x18xf32>
    %61 = vector.extract_strided_slice %60 {offsets = [0, 0, 0], sizes = [2, 18, 18], strides = [1, 1, 1]} : vector<2x20x18xf32> to vector<2x18x18xf32>
    %62 = vector.extract_strided_slice %60 {offsets = [0, 1, 0], sizes = [2, 18, 18], strides = [1, 1, 1]} : vector<2x20x18xf32> to vector<2x18x18xf32>
    %63 = arith.addf %61, %62 : vector<2x18x18xf32>
    %64 = vector.extract_strided_slice %60 {offsets = [0, 2, 0], sizes = [2, 18, 18], strides = [1, 1, 1]} : vector<2x20x18xf32> to vector<2x18x18xf32>
    %65 = arith.addf %63, %64 : vector<2x18x18xf32>
    %66 = vector.broadcast %9 : f32 to vector<18x18xf32>
    %67 = arith.mulf %66, %39 : vector<18x18xf32>
    %68 = vector.shape_cast %67 : vector<18x18xf32> to vector<1x18x18xf32>
    %69 = vector.broadcast %68 : vector<1x18x18xf32> to vector<2x18x18xf32>
    %70 = arith.addf %65, %69 : vector<2x18x18xf32>
    %cst_25 = arith.constant 0.111111112 : f32
    %71 = vector.broadcast %cst_25 : f32 to vector<2x18x18xf32>
    %72 = arith.mulf %70, %71 : vector<2x18x18xf32>
    %cst_26 = arith.constant 0.76999998 : f32
    %cst_27 = arith.constant 8.000000e-01 : f32
    %73 = vector.broadcast %cst_26 : f32 to vector<2x18x18xf32>
    %74 = arith.maximumf %73, %72 : vector<2x18x18xf32>
    %75 = vector.broadcast %cst_27 : f32 to vector<2x18x18xf32>
    %76 = arith.minimumf %75, %74 : vector<2x18x18xf32>
    %c0_28 = arith.constant 0 : index
    %c0_29 = arith.constant 0 : index
    %c0_30 = arith.constant 0 : index
    %c0_31 = arith.constant 0 : index
    %77 = vector.load %arg2[%c0_28, %c0_29, %c0_30, %c0_31] : memref<2x3x18x18xf32, #tpu.memory_space<vmem>>, vector<2x1x18x18xf32>
    %78 = vector.shape_cast %77 : vector<2x1x18x18xf32> to vector<2x18x18xf32>
    %79 = vector.shape_cast %76 : vector<2x18x18xf32> to vector<2x1x18x18xf32>
    tpu.vector_store %arg2[%c0_28, %c0_29, %c0_30, %c0_31], %79 {strides = array<i32>} : memref<2x3x18x18xf32, #tpu.memory_space<vmem>>, vector<2x1x18x18xf32>,
    %c0_32 = arith.constant 0 : index
    %c0_33 = arith.constant 0 : index
    %c0_34 = arith.constant 0 : index
    %c0_35 = arith.constant 0 : index
    %80 = vector.load %arg0[%c0_32, %c0_33, %c0_34, %c0_35] : memref<2x3x16x16xf32, #tpu.memory_space<vmem>>, vector<2x1x16x16xf32>
    %81 = vector.shape_cast %80 : vector<2x1x16x16xf32> to vector<2x16x16xf32>
    %82 = vector.broadcast %3 : f32 to vector<2x16x16xf32>
    %83 = arith.mulf %82, %81 : vector<2x16x16xf32>
    %c0_36 = arith.constant 0 : index
    %c1_37 = arith.constant 1 : index
    %c0_38 = arith.constant 0 : index
    %c0_39 = arith.constant 0 : index
    %84 = vector.load %arg0[%c0_36, %c1_37, %c0_38, %c0_39] : memref<2x3x16x16xf32, #tpu.memory_space<vmem>>, vector<2x1x16x16xf32>
    %85 = vector.shape_cast %84 : vector<2x1x16x16xf32> to vector<2x16x16xf32>
    %86 = vector.broadcast %4 : f32 to vector<2x16x16xf32>
    %87 = arith.mulf %86, %85 : vector<2x16x16xf32>
    %88 = arith.addf %83, %87 : vector<2x16x16xf32>
    %c0_40 = arith.constant 0 : index
    %c2_41 = arith.constant 2 : index
    %c0_42 = arith.constant 0 : index
    %c0_43 = arith.constant 0 : index
    %89 = vector.load %arg0[%c0_40, %c2_41, %c0_42, %c0_43] : memref<2x3x16x16xf32, #tpu.memory_space<vmem>>, vector<2x1x16x16xf32>
    %90 = vector.shape_cast %89 : vector<2x1x16x16xf32> to vector<2x16x16xf32>
    %91 = vector.broadcast %5 : f32 to vector<2x16x16xf32>
    %92 = arith.mulf %91, %90 : vector<2x16x16xf32>
    %93 = arith.addf %88, %92 : vector<2x16x16xf32>
    %c0_44 = arith.constant 0 : index
    %c2_45 = arith.constant 2 : index
    %c2_46 = arith.constant 2 : index
    %94 = vector.load %arg3[%c0_44, %c2_45, %c2_46] : memref<2x20x20xf32, #tpu.memory_space<vmem>>, vector<2x16x16xf32>
    tpu.vector_store %arg3[%c0_44, %c2_45, %c2_46], %93 {strides = array<i32>} : memref<2x20x20xf32, #tpu.memory_space<vmem>>, vector<2x16x16xf32>,
    %c0_47 = arith.constant 0 : index
    %c0_48 = arith.constant 0 : index
    %c0_49 = arith.constant 0 : index
    %95 = vector.load %arg3[%c0_47, %c0_48, %c0_49] : memref<2x20x20xf32, #tpu.memory_space<vmem>>, vector<2x20x20xf32>
    %96 = vector.extract_strided_slice %95 {offsets = [0, 0, 0], sizes = [2, 20, 18], strides = [1, 1, 1]} : vector<2x20x20xf32> to vector<2x20x18xf32>
    %97 = vector.extract_strided_slice %95 {offsets = [0, 0, 1], sizes = [2, 20, 18], strides = [1, 1, 1]} : vector<2x20x20xf32> to vector<2x20x18xf32>
    %98 = arith.addf %96, %97 : vector<2x20x18xf32>
    %99 = vector.extract_strided_slice %95 {offsets = [0, 0, 2], sizes = [2, 20, 18], strides = [1, 1, 1]} : vector<2x20x20xf32> to vector<2x20x18xf32>
    %100 = arith.addf %98, %99 : vector<2x20x18xf32>
    %101 = vector.extract_strided_slice %100 {offsets = [0, 0, 0], sizes = [2, 18, 18], strides = [1, 1, 1]} : vector<2x20x18xf32> to vector<2x18x18xf32>
    %102 = vector.extract_strided_slice %100 {offsets = [0, 1, 0], sizes = [2, 18, 18], strides = [1, 1, 1]} : vector<2x20x18xf32> to vector<2x18x18xf32>
    %103 = arith.addf %101, %102 : vector<2x18x18xf32>
    %104 = vector.extract_strided_slice %100 {offsets = [0, 2, 0], sizes = [2, 18, 18], strides = [1, 1, 1]} : vector<2x20x18xf32> to vector<2x18x18xf32>
    %105 = arith.addf %103, %104 : vector<2x18x18xf32>
    %106 = vector.broadcast %10 : f32 to vector<18x18xf32>
    %107 = arith.mulf %106, %39 : vector<18x18xf32>
    %108 = vector.shape_cast %107 : vector<18x18xf32> to vector<1x18x18xf32>
    %109 = vector.broadcast %108 : vector<1x18x18xf32> to vector<2x18x18xf32>
    %110 = arith.addf %105, %109 : vector<2x18x18xf32>
    %cst_50 = arith.constant 0.111111112 : f32
    %111 = vector.broadcast %cst_50 : f32 to vector<2x18x18xf32>
    %112 = arith.mulf %110, %111 : vector<2x18x18xf32>
    %cst_51 = arith.constant 0.76999998 : f32
    %cst_52 = arith.constant 8.000000e-01 : f32
    %113 = vector.broadcast %cst_51 : f32 to vector<2x18x18xf32>
    %114 = arith.maximumf %113, %112 : vector<2x18x18xf32>
    %115 = vector.broadcast %cst_52 : f32 to vector<2x18x18xf32>
    %116 = arith.minimumf %115, %114 : vector<2x18x18xf32>
    %c0_53 = arith.constant 0 : index
    %c1_54 = arith.constant 1 : index
    %c0_55 = arith.constant 0 : index
    %c0_56 = arith.constant 0 : index
    %117 = vector.load %arg2[%c0_53, %c1_54, %c0_55, %c0_56] : memref<2x3x18x18xf32, #tpu.memory_space<vmem>>, vector<2x1x18x18xf32>
    %118 = vector.shape_cast %117 : vector<2x1x18x18xf32> to vector<2x18x18xf32>
    %119 = vector.shape_cast %116 : vector<2x18x18xf32> to vector<2x1x18x18xf32>
    tpu.vector_store %arg2[%c0_53, %c1_54, %c0_55, %c0_56], %119 {strides = array<i32>} : memref<2x3x18x18xf32, #tpu.memory_space<vmem>>, vector<2x1x18x18xf32>,
    %c0_57 = arith.constant 0 : index
    %c0_58 = arith.constant 0 : index
    %c0_59 = arith.constant 0 : index
    %c0_60 = arith.constant 0 : index
    %120 = vector.load %arg0[%c0_57, %c0_58, %c0_59, %c0_60] : memref<2x3x16x16xf32, #tpu.memory_space<vmem>>, vector<2x1x16x16xf32>
    %121 = vector.shape_cast %120 : vector<2x1x16x16xf32> to vector<2x16x16xf32>
    %122 = vector.broadcast %6 : f32 to vector<2x16x16xf32>
    %123 = arith.mulf %122, %121 : vector<2x16x16xf32>
    %c0_61 = arith.constant 0 : index
    %c1_62 = arith.constant 1 : index
    %c0_63 = arith.constant 0 : index
    %c0_64 = arith.constant 0 : index
    %124 = vector.load %arg0[%c0_61, %c1_62, %c0_63, %c0_64] : memref<2x3x16x16xf32, #tpu.memory_space<vmem>>, vector<2x1x16x16xf32>
    %125 = vector.shape_cast %124 : vector<2x1x16x16xf32> to vector<2x16x16xf32>
    %126 = vector.broadcast %7 : f32 to vector<2x16x16xf32>
    %127 = arith.mulf %126, %125 : vector<2x16x16xf32>
    %128 = arith.addf %123, %127 : vector<2x16x16xf32>
    %c0_65 = arith.constant 0 : index
    %c2_66 = arith.constant 2 : index
    %c0_67 = arith.constant 0 : index
    %c0_68 = arith.constant 0 : index
    %129 = vector.load %arg0[%c0_65, %c2_66, %c0_67, %c0_68] : memref<2x3x16x16xf32, #tpu.memory_space<vmem>>, vector<2x1x16x16xf32>
    %130 = vector.shape_cast %129 : vector<2x1x16x16xf32> to vector<2x16x16xf32>
    %131 = vector.broadcast %8 : f32 to vector<2x16x16xf32>
    %132 = arith.mulf %131, %130 : vector<2x16x16xf32>
    %133 = arith.addf %128, %132 : vector<2x16x16xf32>
    %c0_69 = arith.constant 0 : index
    %c2_70 = arith.constant 2 : index
    %c2_71 = arith.constant 2 : index
    %134 = vector.load %arg3[%c0_69, %c2_70, %c2_71] : memref<2x20x20xf32, #tpu.memory_space<vmem>>, vector<2x16x16xf32>
    tpu.vector_store %arg3[%c0_69, %c2_70, %c2_71], %133 {strides = array<i32>} : memref<2x20x20xf32, #tpu.memory_space<vmem>>, vector<2x16x16xf32>,
    %c0_72 = arith.constant 0 : index
    %c0_73 = arith.constant 0 : index
    %c0_74 = arith.constant 0 : index
    %135 = vector.load %arg3[%c0_72, %c0_73, %c0_74] : memref<2x20x20xf32, #tpu.memory_space<vmem>>, vector<2x20x20xf32>
    %136 = vector.extract_strided_slice %135 {offsets = [0, 0, 0], sizes = [2, 20, 18], strides = [1, 1, 1]} : vector<2x20x20xf32> to vector<2x20x18xf32>
    %137 = vector.extract_strided_slice %135 {offsets = [0, 0, 1], sizes = [2, 20, 18], strides = [1, 1, 1]} : vector<2x20x20xf32> to vector<2x20x18xf32>
    %138 = arith.addf %136, %137 : vector<2x20x18xf32>
    %139 = vector.extract_strided_slice %135 {offsets = [0, 0, 2], sizes = [2, 20, 18], strides = [1, 1, 1]} : vector<2x20x20xf32> to vector<2x20x18xf32>
    %140 = arith.addf %138, %139 : vector<2x20x18xf32>
    %141 = vector.extract_strided_slice %140 {offsets = [0, 0, 0], sizes = [2, 18, 18], strides = [1, 1, 1]} : vector<2x20x18xf32> to vector<2x18x18xf32>
    %142 = vector.extract_strided_slice %140 {offsets = [0, 1, 0], sizes = [2, 18, 18], strides = [1, 1, 1]} : vector<2x20x18xf32> to vector<2x18x18xf32>
    %143 = arith.addf %141, %142 : vector<2x18x18xf32>
    %144 = vector.extract_strided_slice %140 {offsets = [0, 2, 0], sizes = [2, 18, 18], strides = [1, 1, 1]} : vector<2x20x18xf32> to vector<2x18x18xf32>
    %145 = arith.addf %143, %144 : vector<2x18x18xf32>
    %146 = vector.broadcast %11 : f32 to vector<18x18xf32>
    %147 = arith.mulf %146, %39 : vector<18x18xf32>
    %148 = vector.shape_cast %147 : vector<18x18xf32> to vector<1x18x18xf32>
    %149 = vector.broadcast %148 : vector<1x18x18xf32> to vector<2x18x18xf32>
    %150 = arith.addf %145, %149 : vector<2x18x18xf32>
    %cst_75 = arith.constant 0.111111112 : f32
    %151 = vector.broadcast %cst_75 : f32 to vector<2x18x18xf32>
    %152 = arith.mulf %150, %151 : vector<2x18x18xf32>
    %cst_76 = arith.constant 0.76999998 : f32
    %cst_77 = arith.constant 8.000000e-01 : f32
    %153 = vector.broadcast %cst_76 : f32 to vector<2x18x18xf32>
    %154 = arith.maximumf %153, %152 : vector<2x18x18xf32>
    %155 = vector.broadcast %cst_77 : f32 to vector<2x18x18xf32>
    %156 = arith.minimumf %155, %154 : vector<2x18x18xf32>
    %c0_78 = arith.constant 0 : index
    %c2_79 = arith.constant 2 : index
    %c0_80 = arith.constant 0 : index
    %c0_81 = arith.constant 0 : index
    %157 = vector.load %arg2[%c0_78, %c2_79, %c0_80, %c0_81] : memref<2x3x18x18xf32, #tpu.memory_space<vmem>>, vector<2x1x18x18xf32>
    %158 = vector.shape_cast %157 : vector<2x1x18x18xf32> to vector<2x18x18xf32>
    %159 = vector.shape_cast %156 : vector<2x18x18xf32> to vector<2x1x18x18xf32>
    tpu.vector_store %arg2[%c0_78, %c2_79, %c0_80, %c0_81], %159 {strides = array<i32>} : memref<2x3x18x18xf32, #tpu.memory_space<vmem>>, vector<2x1x18x18xf32>,
    return
  }
}

</mosaic_0001>

<llo_original>
// kernel: model_forward.1
$region0: #{model_forward.1}
  #allocation0 [shape = 'u32[]', space=smem, size = 0x4, offset = 0x4, fixed_abs, tag = 'smem constant byte address 0x4 - core index']
  #allocation1 [shape = 'u32[144,128]{1,0:T(1,128)}', space=vmem, size = 0x12000, scoped, tag = 'internal scratch']
  #allocation2 [shape = 'f32[2,20,20]{2,1,0:T(8,128)}', space=vmem, size = 0x6000, scoped, tag = 'scratch operand']
  %s0 = inlined_call_operand.hbm [shape: f32[2,3,16,16], index: 0, kind: input, shape index: {}]
  %s1 = inlined_call_operand.vmem [shape: f32[12], index: 1, kind: input, shape index: {}]
  %s2 = inlined_call_operand.vmem [shape: f32[2,3,18,18], index: 2, kind: output, shape index: {}]
  %s3 = sld [smem:[#allocation0]]
  $region26: #{model_forward.1} parent=0
    _
  %s5 = ssub.s32 1, %s3
  %s6 = scalar_select 0, %s5, %s3
  $region1: #{model_forward.1} parent=0
    #allocation3 [shape = 'u8[49152]{0}', space=vmem, size = 0xc000, scoped, tag = 'input window, operand 0, single buffered']
    #allocation4 [shape = 's32[1]{0}', space=sflag, size = 0x4, scoped, tag = 'scoped memory for model_forward.1']
    #allocation5 [shape = 's32[1]{0}', space=sflag, size = 0x4, scoped, tag = 'scoped memory for model_forward.1']
    #allocation6 [shape = 'u8[512]{0}', space=smem, size = 0x200, scoped, tag = 'input window, operand 1, single buffered']
    %7 = vsyncpa [#allocation4], 0
    %8 = vsyncpa [#allocation5], 0
    // Predicated region
    $region2: #{model_forward.1} parent=1 // pred_check
      _
    $region3: #{model_forward.1} parent=1 // pred_check_branch
      %10 = sbr.rel (0) target = $region5
    $region4: #{model_forward.1} parent=1 // pred_region
      %s12 = ssub.s32 1536, 1536
      %13 = vsyncadd [#allocation4], %s12
      %s14 = sshll.u32 [#allocation3], 4
      %s15 = int_to_ptr.vmem [resolvable:$true] %s14
      %20 = dma.hbm_to_vmem [thread:$0]  %s0, 1536, %s15, [#allocation4], 128, 128, 8
    $region5: #{model_forward.1} parent=1 // pred_fallthru
      _
    // Predicated region
    $region6: #{model_forward.1} parent=1 // pred_check
      _
    $region7: #{model_forward.1} parent=1 // pred_check_branch
      %22 = sbr.rel (0) target = $region9
    $region8: #{model_forward.1} parent=1 // pred_region
      %s24 = ssub.s32 16, 16
      %25 = vsyncadd [#allocation5], %s24
      %s27 = sshll.u32 %s1, 4
      %s28 = int_to_ptr.vmem [resolvable:$true] %s27
      %30 = dma.vmem_to_smem %s28, 16, [#allocation6], [#allocation5]
    $region9: #{model_forward.1} parent=1 // pred_fallthru
      _
    // Predicated region
    $region10: #{model_forward.1} parent=1 // pred_check
      _
    $region11: #{model_forward.1} parent=1 // pred_check_branch
      %32 = sbr.rel (0) target = $region13
    $region12: #{model_forward.1} parent=1 // pred_region
      %33 = dma.done [#allocation4], 1536
    $region13: #{model_forward.1} parent=1 // pred_fallthru
      _
    // Predicated region
    $region14: #{model_forward.1} parent=1 // pred_check
      _
    $region15: #{model_forward.1} parent=1 // pred_check_branch
      %35 = sbr.rel (0) target = $region17
    $region16: #{model_forward.1} parent=1 // pred_region
      %36 = dma.done [#allocation5], 16
    $region17: #{model_forward.1} parent=1 // pred_fallthru
      _
    %37 = sfence
    %s38 = sld [smem:[#allocation6]]
    %s39 = sld [smem:[#allocation6 + $0x1]]
    %s40 = sld [smem:[#allocation6 + $0x2]]
    %s41 = sld [smem:[#allocation6 + $0x3]]
    %s42 = sld [smem:[#allocation6 + $0x4]]
    %s43 = sld [smem:[#allocation6 + $0x5]]
    %s44 = sld [smem:[#allocation6 + $0x6]]
    %s45 = sld [smem:[#allocation6 + $0x7]]
    %s46 = sld [smem:[#allocation6 + $0x8]]
    %s47 = sld [smem:[#allocation6 + $0x9]]
    %s48 = sld [smem:[#allocation6 + $0xa]]
    %s49 = sld [smem:[#allocation6 + $0xb]]
    %vm50 = vcmask 162816
    %51 = vst.msk [vmem:[#allocation2] sm:$0xff] %vm50, 0.0
    %52 = vst.msk [vmem:[#allocation2 + $0x8] sm:$0xff] %vm50, 0.0
    %vm53 = vcmask 158720
    %54 = vst.msk [vmem:[#allocation2 + $0x10] sm:$0xf] %vm53, 0.0
    %55 = vst.msk [vmem:[#allocation2 + $0x18] sm:$0xff] %vm50, 0.0
    %56 = vst.msk [vmem:[#allocation2 + $0x20] sm:$0xff] %vm50, 0.0
    %57 = vst.msk [vmem:[#allocation2 + $0x28] sm:$0xf] %vm53, 0.0
    %v58 = vlaneseq
    %v59 = vshrl.u32 %v58, 7
    %v60 = vadd.s32 %v59, 8
    %v61 = vadd.s32 %v59, 16
    %v62 = vlaneseq
    %v63 = vand.u32 %v62, 127
    %vm64 = vcmp.ge.s32.totalorder %v59, 1
    %vm65 = vcmp.ge.s32.totalorder %v60, 1
    %vm66 = vcmp.ge.s32.totalorder %v61, 1
    %vm67 = vcmp.le.s32.totalorder %v59, 18
    %vm68 = vcmp.le.s32.totalorder %v60, 18
    %vm69 = vcmp.le.s32.totalorder %v61, 18
    %vm70 = vmand %vm64, %vm67
    %vm71 = vmand %vm65, %vm68
    %vm72 = vmand %vm66, %vm69
    %vm73 = vcmp.ge.s32.totalorder %v63, 1
    %vm74 = vmand %vm70, %vm73
    %vm75 = vmand %vm71, %vm73
    %vm76 = vmand %vm72, %vm73
    %vm77 = vcmp.le.s32.totalorder %v63, 18
    %vm78 = vmand %vm74, %vm77
    %vm79 = vmand %vm75, %vm77
    %vm80 = vmand %vm76, %vm77
    %v81 = vsel %vm78, 1.0, 0.0
    %v82 = vsel %vm79, 1.0, 0.0
    %v83 = vsel %vm80, 1.0, 0.0
    %87 = vrot.lane.b32.xlu0 %v81, 127
    %v88 = vpop.permute.xlu0 %87
    %89 = vrot.lane.b32.xlu0 %v82, 127
    %v90 = vpop.permute.xlu0 %89
    %91 = vrot.lane.b32.xlu0 %v83, 127
    %v92 = vpop.permute.xlu0 %91
    %v96 = vadd.f32 %v81, %v88
    %v97 = vadd.f32 %v82, %v90
    %v98 = vadd.f32 %v83, %v92
    %99 = vrot.lane.b32.xlu0 %v81, 126
    %v100 = vpop.permute.xlu0 %99
    %101 = vrot.lane.b32.xlu0 %v82, 126
    %v102 = vpop.permute.xlu0 %101
    %103 = vrot.lane.b32.xlu0 %v83, 126
    %v104 = vpop.permute.xlu0 %103
    %v108 = vadd.f32 %v96, %v100
    %v109 = vadd.f32 %v97, %v102
    %v110 = vadd.f32 %v98, %v104
    %vm114 = vcmask 1046528
    %v115 = vrot.slane %v108, 1
    %v116 = vrot.slane %v109, 1
    %v117 = vsel %vm114, %v115, %v116
    %v118 = vrot.slane %v110, 1
    %v119 = vsel %vm114, %v116, %v118
    %v123 = vadd.f32 %v108, %v117
    %v124 = vadd.f32 %v109, %v119
    %v125 = vadd.f32 %v110, %v118
    %vm126 = vcmask 1045504
    %v127 = vrot.slane %v108, 2
    %v128 = vrot.slane %v109, 2
    %v129 = vsel %vm126, %v127, %v128
    %v130 = vrot.slane %v110, 2
    %v131 = vsel %vm126, %v128, %v130
    %v135 = vadd.f32 %v123, %v129
    %v136 = vadd.f32 %v124, %v131
    %v137 = vadd.f32 %v125, %v130
    %v138 = vld [vmem:[#allocation3] sm:$0xff]
    %v139 = vld [vmem:[#allocation3 + $0x8] sm:$0xff]
    %v140 = vld [vmem:[#allocation3 + $0x30] sm:$0xff]
    %v141 = vld [vmem:[#allocation3 + $0x38] sm:$0xff]
    %v142 = vstv %s38
    %v143 = vmul.f32 %v142, %v138
    %v144 = vmul.f32 %v142, %v139
    %v145 = vmul.f32 %v142, %v140
    %v146 = vmul.f32 %v142, %v141
    %s147 = scalar_lea.vmem [#allocation3], 16
    %v148 = vld [vmem:[%s147] sm:$0xff]
    %v149 = vld [vmem:[%s147 + $0x8] sm:$0xff]
    %v150 = vld [vmem:[%s147 + $0x30] sm:$0xff]
    %v151 = vld [vmem:[%s147 + $0x38] sm:$0xff]
    %v152 = vstv %s39
    %v153 = vmul.f32 %v152, %v148
    %v154 = vmul.f32 %v152, %v149
    %v155 = vmul.f32 %v152, %v150
    %v156 = vmul.f32 %v152, %v151
    %v157 = vadd.f32 %v143, %v153
    %v158 = vadd.f32 %v144, %v154
    %v159 = vadd.f32 %v145, %v155
    %v160 = vadd.f32 %v146, %v156
    %s161 = scalar_lea.vmem [#allocation3], 32
    %v162 = vld [vmem:[%s161] sm:$0xff]
    %v163 = vld [vmem:[%s161 + $0x8] sm:$0xff]
    %v164 = vld [vmem:[%s161 + $0x30] sm:$0xff]
    %v165 = vld [vmem:[%s161 + $0x38] sm:$0xff]
    %v166 = vstv %s40
    %v167 = vmul.f32 %v166, %v162
    %v168 = vmul.f32 %v166, %v163
    %v169 = vmul.f32 %v166, %v164
    %v170 = vmul.f32 %v166, %v165
    %v171 = vadd.f32 %v157, %v167
    %v172 = vadd.f32 %v158, %v168
    %v173 = vadd.f32 %v159, %v169
    %v174 = vadd.f32 %v160, %v170
    %179 = vrot.lane.b32.xlu0 %v171, 2
    %v180 = vpop.permute.xlu0 %179
    %181 = vrot.lane.b32.xlu0 %v172, 2
    %v182 = vpop.permute.xlu0 %181
    %183 = vrot.lane.b32.xlu0 %v173, 2
    %v184 = vpop.permute.xlu0 %183
    %185 = vrot.lane.b32.xlu0 %v174, 2
    %v186 = vpop.permute.xlu0 %185
    %vm191 = vcmask 146448
    %192 = vst.msk [vmem:[#allocation2 + $0x2] sm:$0xff] %vm191, %v180
    %193 = vst.msk [vmem:[#allocation2 + $0xa] sm:$0xff] %vm191, %v182
    %194 = vst.msk [vmem:[#allocation2 + $0x1a] sm:$0xff] %vm191, %v184
    %195 = vst.msk [vmem:[#allocation2 + $0x22] sm:$0xff] %vm191, %v186
    %v196 = vld [vmem:[#allocation2] sm:$0xff]
    %v197 = vld [vmem:[#allocation2 + $0x8] sm:$0xff]
    %v198 = vld [vmem:[#allocation2 + $0x10] sm:$0xf]
    %v199 = vld [vmem:[#allocation2 + $0x18] sm:$0xff]
    %v200 = vld [vmem:[#allocation2 + $0x20] sm:$0xff]
    %v201 = vld [vmem:[#allocation2 + $0x28] sm:$0xf]
    %208 = vrot.lane.b32.xlu0 %v196, 127
    %v209 = vpop.permute.xlu0 %208
    %210 = vrot.lane.b32.xlu0 %v197, 127
    %v211 = vpop.permute.xlu0 %210
    %212 = vrot.lane.b32.xlu0 %v198, 127
    %v213 = vpop.permute.xlu0 %212
    %214 = vrot.lane.b32.xlu0 %v199, 127
    %v215 = vpop.permute.xlu0 %214
    %216 = vrot.lane.b32.xlu0 %v200, 127
    %v217 = vpop.permute.xlu0 %216
    %218 = vrot.lane.b32.xlu0 %v201, 127
    %v219 = vpop.permute.xlu0 %218
    %v226 = vadd.f32 %v196, %v209
    %v227 = vadd.f32 %v197, %v211
    %v228 = vadd.f32 %v198, %v213
    %v229 = vadd.f32 %v199, %v215
    %v230 = vadd.f32 %v200, %v217
    %v231 = vadd.f32 %v201, %v219
    %232 = vrot.lane.b32.xlu0 %v196, 126
    %v233 = vpop.permute.xlu0 %232
    %234 = vrot.lane.b32.xlu0 %v197, 126
    %v235 = vpop.permute.xlu0 %234
    %236 = vrot.lane.b32.xlu0 %v198, 126
    %v237 = vpop.permute.xlu0 %236
    %238 = vrot.lane.b32.xlu0 %v199, 126
    %v239 = vpop.permute.xlu0 %238
    %240 = vrot.lane.b32.xlu0 %v200, 126
    %v241 = vpop.permute.xlu0 %240
    %242 = vrot.lane.b32.xlu0 %v201, 126
    %v243 = vpop.permute.xlu0 %242
    %v250 = vadd.f32 %v226, %v233
    %v251 = vadd.f32 %v227, %v235
    %v252 = vadd.f32 %v228, %v237
    %v253 = vadd.f32 %v229, %v239
    %v254 = vadd.f32 %v230, %v241
    %v255 = vadd.f32 %v231, %v243
    %v262 = vrot.slane %v250, 1
    %v263 = vrot.slane %v251, 1
    %v264 = vsel %vm114, %v262, %v263
    %v265 = vrot.slane %v252, 1
    %v266 = vsel %vm114, %v263, %v265
    %v267 = vrot.slane %v253, 1
    %v268 = vrot.slane %v254, 1
    %v269 = vsel %vm114, %v267, %v268
    %v270 = vrot.slane %v255, 1
    %v271 = vsel %vm114, %v268, %v270
    %v278 = vadd.f32 %v250, %v264
    %v279 = vadd.f32 %v251, %v266
    %v280 = vadd.f32 %v252, %v265
    %v281 = vadd.f32 %v253, %v269
    %v282 = vadd.f32 %v254, %v271
    %v283 = vadd.f32 %v255, %v270
    %v284 = vrot.slane %v250, 2
    %v285 = vrot.slane %v251, 2
    %v286 = vsel %vm126, %v284, %v285
    %v287 = vrot.slane %v252, 2
    %v288 = vsel %vm126, %v285, %v287
    %v289 = vrot.slane %v253, 2
    %v290 = vrot.slane %v254, 2
    %v291 = vsel %vm126, %v289, %v290
    %v292 = vrot.slane %v255, 2
    %v293 = vsel %vm126, %v290, %v292
    %v300 = vadd.f32 %v278, %v286
    %v301 = vadd.f32 %v279, %v288
    %v302 = vadd.f32 %v280, %v287
    %v303 = vadd.f32 %v281, %v291
    %v304 = vadd.f32 %v282, %v293
    %v305 = vadd.f32 %v283, %v292
    %v306 = vstv %s47
    %v307 = vmul.f32 %v306, %v135
    %v308 = vmul.f32 %v306, %v136
    %v309 = vmul.f32 %v306, %v137
    %v310 = vadd.f32 %v300, %v307
    %v311 = vadd.f32 %v301, %v308
    %v312 = vadd.f32 %v302, %v309
    %v313 = vadd.f32 %v303, %v307
    %v314 = vadd.f32 %v304, %v308
    %v315 = vadd.f32 %v305, %v309
    %v316 = vmul.f32 %v310, 0.11111111
    %v317 = vmul.f32 %v311, 0.11111111
    %v318 = vmul.f32 %v312, 0.11111111
    %v319 = vmul.f32 %v313, 0.11111111
    %v320 = vmul.f32 %v314, 0.11111111
    %v321 = vmul.f32 %v315, 0.11111111
    %v322 = vmax.f32 %v316, 0.77
    %v323 = vmax.f32 %v317, 0.77
    %v324 = vmax.f32 %v318, 0.77
    %v325 = vmax.f32 %v319, 0.77
    %v326 = vmax.f32 %v320, 0.77
    %v327 = vmax.f32 %v321, 0.77
    %v328 = vmin.f32 %v322, 0.8
    %v329 = vmin.f32 %v323, 0.8
    %v330 = vmin.f32 %v324, 0.8
    %v331 = vmin.f32 %v325, 0.8
    %v332 = vmin.f32 %v326, 0.8
    %v333 = vmin.f32 %v327, 0.8
    %vm334 = vcmask 146432
    %335 = vst.msk [vmem:[%s2] sm:$0xff] %vm334, %v328
    %336 = vst.msk [vmem:[%s2 + $0x8] sm:$0xff] %vm334, %v329
    %vm337 = vcmask 140288
    %338 = vst.msk [vmem:[%s2 + $0x10] sm:$0x3] %vm337, %v330
    %339 = vst.msk [vmem:[%s2 + $0x48] sm:$0xff] %vm334, %v331
    %340 = vst.msk [vmem:[%s2 + $0x50] sm:$0xff] %vm334, %v332
    %341 = vst.msk [vmem:[%s2 + $0x58] sm:$0x3] %vm337, %v333
    %v342 = vld [vmem:[#allocation3] sm:$0xff]
    %v343 = vld [vmem:[#allocation3 + $0x8] sm:$0xff]
    %v344 = vld [vmem:[#allocation3 + $0x30] sm:$0xff]
    %v345 = vld [vmem:[#allocation3 + $0x38] sm:$0xff]
    %v346 = vstv %s41
    %v347 = vmul.f32 %v346, %v342
    %v348 = vmul.f32 %v346, %v343
    %v349 = vmul.f32 %v346, %v344
    %v350 = vmul.f32 %v346, %v345
    %v351 = vld [vmem:[%s147] sm:$0xff]
    %v352 = vld [vmem:[%s147 + $0x8] sm:$0xff]
    %v353 = vld [vmem:[%s147 + $0x30] sm:$0xff]
    %v354 = vld [vmem:[%s147 + $0x38] sm:$0xff]
    %v355 = vstv %s42
    %v356 = vmul.f32 %v355, %v351
    %v357 = vmul.f32 %v355, %v352
    %v358 = vmul.f32 %v355, %v353
    %v359 = vmul.f32 %v355, %v354
    %v360 = vadd.f32 %v347, %v356
    %v361 = vadd.f32 %v348, %v357
    %v362 = vadd.f32 %v349, %v358
    %v363 = vadd.f32 %v350, %v359
    %v364 = vld [vmem:[%s161] sm:$0xff]
    %v365 = vld [vmem:[%s161 + $0x8] sm:$0xff]
    %v366 = vld [vmem:[%s161 + $0x30] sm:$0xff]
    %v367 = vld [vmem:[%s161 + $0x38] sm:$0xff]
    %v368 = vstv %s43
    %v369 = vmul.f32 %v368, %v364
    %v370 = vmul.f32 %v368, %v365
    %v371 = vmul.f32 %v368, %v366
    %v372 = vmul.f32 %v368, %v367
    %v373 = vadd.f32 %v360, %v369
    %v374 = vadd.f32 %v361, %v370
    %v375 = vadd.f32 %v362, %v371
    %v376 = vadd.f32 %v363, %v372
    %381 = vrot.lane.b32.xlu0 %v373, 2
    %v382 = vpop.permute.xlu0 %381
    %383 = vrot.lane.b32.xlu0 %v374, 2
    %v384 = vpop.permute.xlu0 %383
    %385 = vrot.lane.b32.xlu0 %v375, 2
    %v386 = vpop.permute.xlu0 %385
    %387 = vrot.lane.b32.xlu0 %v376, 2
    %v388 = vpop.permute.xlu0 %387
    %393 = vst.msk [vmem:[#allocation2 + $0x2] sm:$0xff] %vm191, %v382
    %394 = vst.msk [vmem:[#allocation2 + $0xa] sm:$0xff] %vm191, %v384
    %395 = vst.msk [vmem:[#allocation2 + $0x1a] sm:$0xff] %vm191, %v386
    %396 = vst.msk [vmem:[#allocation2 + $0x22] sm:$0xff] %vm191, %v388
    %v397 = vld [vmem:[#allocation2] sm:$0xff]
    %v398 = vld [vmem:[#allocation2 + $0x8] sm:$0xff]
    %v399 = vld [vmem:[#allocation2 + $0x10] sm:$0xf]
    %v400 = vld [vmem:[#allocation2 + $0x18] sm:$0xff]
    %v401 = vld [vmem:[#allocation2 + $0x20] sm:$0xff]
    %v402 = vld [vmem:[#allocation2 + $0x28] sm:$0xf]
    %409 = vrot.lane.b32.xlu0 %v397, 127
    %v410 = vpop.permute.xlu0 %409
    %411 = vrot.lane.b32.xlu0 %v398, 127
    %v412 = vpop.permute.xlu0 %411
    %413 = vrot.lane.b32.xlu0 %v399, 127
    %v414 = vpop.permute.xlu0 %413
    %415 = vrot.lane.b32.xlu0 %v400, 127
    %v416 = vpop.permute.xlu0 %415
    %417 = vrot.lane.b32.xlu0 %v401, 127
    %v418 = vpop.permute.xlu0 %417
    %419 = vrot.lane.b32.xlu0 %v402, 127
    %v420 = vpop.permute.xlu0 %419
    %v427 = vadd.f32 %v397, %v410
    %v428 = vadd.f32 %v398, %v412
    %v429 = vadd.f32 %v399, %v414
    %v430 = vadd.f32 %v400, %v416
    %v431 = vadd.f32 %v401, %v418
    %v432 = vadd.f32 %v402, %v420
    %433 = vrot.lane.b32.xlu0 %v397, 126
    %v434 = vpop.permute.xlu0 %433
    %435 = vrot.lane.b32.xlu0 %v398, 126
    %v436 = vpop.permute.xlu0 %435
    %437 = vrot.lane.b32.xlu0 %v399, 126
    %v438 = vpop.permute.xlu0 %437
    %439 = vrot.lane.b32.xlu0 %v400, 126
    %v440 = vpop.permute.xlu0 %439
    %441 = vrot.lane.b32.xlu0 %v401, 126
    %v442 = vpop.permute.xlu0 %441
    %443 = vrot.lane.b32.xlu0 %v402, 126
    %v444 = vpop.permute.xlu0 %443
    %v451 = vadd.f32 %v427, %v434
    %v452 = vadd.f32 %v428, %v436
    %v453 = vadd.f32 %v429, %v438
    %v454 = vadd.f32 %v430, %v440
    %v455 = vadd.f32 %v431, %v442
    %v456 = vadd.f32 %v432, %v444
    %v463 = vrot.slane %v451, 1
    %v464 = vrot.slane %v452, 1
    %v465 = vsel %vm114, %v463, %v464
    %v466 = vrot.slane %v453, 1
    %v467 = vsel %vm114, %v464, %v466
    %v468 = vrot.slane %v454, 1
    %v469 = vrot.slane %v455, 1
    %v470 = vsel %vm114, %v468, %v469
    %v471 = vrot.slane %v456, 1
    %v472 = vsel %vm114, %v469, %v471
    %v479 = vadd.f32 %v451, %v465
    %v480 = vadd.f32 %v452, %v467
    %v481 = vadd.f32 %v453, %v466
    %v482 = vadd.f32 %v454, %v470
    %v483 = vadd.f32 %v455, %v472
    %v484 = vadd.f32 %v456, %v471
    %v485 = vrot.slane %v451, 2
    %v486 = vrot.slane %v452, 2
    %v487 = vsel %vm126, %v485, %v486
    %v488 = vrot.slane %v453, 2
    %v489 = vsel %vm126, %v486, %v488
    %v490 = vrot.slane %v454, 2
    %v491 = vrot.slane %v455, 2
    %v492 = vsel %vm126, %v490, %v491
    %v493 = vrot.slane %v456, 2
    %v494 = vsel %vm126, %v491, %v493
    %v501 = vadd.f32 %v479, %v487
    %v502 = vadd.f32 %v480, %v489
    %v503 = vadd.f32 %v481, %v488
    %v504 = vadd.f32 %v482, %v492
    %v505 = vadd.f32 %v483, %v494
    %v506 = vadd.f32 %v484, %v493
    %v507 = vstv %s48
    %v508 = vmul.f32 %v507, %v135
    %v509 = vmul.f32 %v507, %v136
    %v510 = vmul.f32 %v507, %v137
    %v511 = vadd.f32 %v501, %v508
    %v512 = vadd.f32 %v502, %v509
    %v513 = vadd.f32 %v503, %v510
    %v514 = vadd.f32 %v504, %v508
    %v515 = vadd.f32 %v505, %v509
    %v516 = vadd.f32 %v506, %v510
    %v517 = vmul.f32 %v511, 0.11111111
    %v518 = vmul.f32 %v512, 0.11111111
    %v519 = vmul.f32 %v513, 0.11111111
    %v520 = vmul.f32 %v514, 0.11111111
    %v521 = vmul.f32 %v515, 0.11111111
    %v522 = vmul.f32 %v516, 0.11111111
    %v523 = vmax.f32 %v517, 0.77
    %v524 = vmax.f32 %v518, 0.77
    %v525 = vmax.f32 %v519, 0.77
    %v526 = vmax.f32 %v520, 0.77
    %v527 = vmax.f32 %v521, 0.77
    %v528 = vmax.f32 %v522, 0.77
    %v529 = vmin.f32 %v523, 0.8
    %v530 = vmin.f32 %v524, 0.8
    %v531 = vmin.f32 %v525, 0.8
    %v532 = vmin.f32 %v526, 0.8
    %v533 = vmin.f32 %v527, 0.8
    %v534 = vmin.f32 %v528, 0.8
    %s535 = scalar_lea.vmem %s2, 24
    %536 = vst.msk [vmem:[%s535] sm:$0xff] %vm334, %v529
    %537 = vst.msk [vmem:[%s535 + $0x8] sm:$0xff] %vm334, %v530
    %538 = vst.msk [vmem:[%s535 + $0x10] sm:$0x3] %vm337, %v531
    %539 = vst.msk [vmem:[%s535 + $0x48] sm:$0xff] %vm334, %v532
    %540 = vst.msk [vmem:[%s535 + $0x50] sm:$0xff] %vm334, %v533
    %541 = vst.msk [vmem:[%s535 + $0x58] sm:$0x3] %vm337, %v534
    %v542 = vld [vmem:[#allocation3] sm:$0xff]
    %v543 = vld [vmem:[#allocation3 + $0x8] sm:$0xff]
    %v544 = vld [vmem:[#allocation3 + $0x30] sm:$0xff]
    %v545 = vld [vmem:[#allocation3 + $0x38] sm:$0xff]
    %v546 = vstv %s44
    %v547 = vmul.f32 %v546, %v542
    %v548 = vmul.f32 %v546, %v543
    %v549 = vmul.f32 %v546, %v544
    %v550 = vmul.f32 %v546, %v545
    %v551 = vld [vmem:[%s147] sm:$0xff]
    %v552 = vld [vmem:[%s147 + $0x8] sm:$0xff]
    %v553 = vld [vmem:[%s147 + $0x30] sm:$0xff]
    %v554 = vld [vmem:[%s147 + $0x38] sm:$0xff]
    %v555 = vstv %s45
    %v556 = vmul.f32 %v555, %v551
    %v557 = vmul.f32 %v555, %v552
    %v558 = vmul.f32 %v555, %v553
    %v559 = vmul.f32 %v555, %v554
    %v560 = vadd.f32 %v547, %v556
    %v561 = vadd.f32 %v548, %v557
    %v562 = vadd.f32 %v549, %v558
    %v563 = vadd.f32 %v550, %v559
    %v564 = vld [vmem:[%s161] sm:$0xff]
    %v565 = vld [vmem:[%s161 + $0x8] sm:$0xff]
    %v566 = vld [vmem:[%s161 + $0x30] sm:$0xff]
    %v567 = vld [vmem:[%s161 + $0x38] sm:$0xff]
    %v568 = vstv %s46
    %v569 = vmul.f32 %v568, %v564
    %v570 = vmul.f32 %v568, %v565
    %v571 = vmul.f32 %v568, %v566
    %v572 = vmul.f32 %v568, %v567
    %v573 = vadd.f32 %v560, %v569
    %v574 = vadd.f32 %v561, %v570
    %v575 = vadd.f32 %v562, %v571
    %v576 = vadd.f32 %v563, %v572
    %581 = vrot.lane.b32.xlu0 %v573, 2
    %v582 = vpop.permute.xlu0 %581
    %583 = vrot.lane.b32.xlu0 %v574, 2
    %v584 = vpop.permute.xlu0 %583
    %585 = vrot.lane.b32.xlu0 %v575, 2
    %v586 = vpop.permute.xlu0 %585
    %587 = vrot.lane.b32.xlu0 %v576, 2
    %v588 = vpop.permute.xlu0 %587
    %593 = vst.msk [vmem:[#allocation2 + $0x2] sm:$0xff] %vm191, %v582
    %594 = vst.msk [vmem:[#allocation2 + $0xa] sm:$0xff] %vm191, %v584
    %595 = vst.msk [vmem:[#allocation2 + $0x1a] sm:$0xff] %vm191, %v586
    %596 = vst.msk [vmem:[#allocation2 + $0x22] sm:$0xff] %vm191, %v588
    %v597 = vld [vmem:[#allocation2] sm:$0xff]
    %v598 = vld [vmem:[#allocation2 + $0x8] sm:$0xff]
    %v599 = vld [vmem:[#allocation2 + $0x10] sm:$0xf]
    %v600 = vld [vmem:[#allocation2 + $0x18] sm:$0xff]
    %v601 = vld [vmem:[#allocation2 + $0x20] sm:$0xff]
    %v602 = vld [vmem:[#allocation2 + $0x28] sm:$0xf]
    %609 = vrot.lane.b32.xlu0 %v597, 127
    %v610 = vpop.permute.xlu0 %609
    %611 = vrot.lane.b32.xlu0 %v598, 127
    %v612 = vpop.permute.xlu0 %611
    %613 = vrot.lane.b32.xlu0 %v599, 127
    %v614 = vpop.permute.xlu0 %613
    %615 = vrot.lane.b32.xlu0 %v600, 127
    %v616 = vpop.permute.xlu0 %615
    %617 = vrot.lane.b32.xlu0 %v601, 127
    %v618 = vpop.permute.xlu0 %617
    %619 = vrot.lane.b32.xlu0 %v602, 127
    %v620 = vpop.permute.xlu0 %619
    %v627 = vadd.f32 %v597, %v610
    %v628 = vadd.f32 %v598, %v612
    %v629 = vadd.f32 %v599, %v614
    %v630 = vadd.f32 %v600, %v616
    %v631 = vadd.f32 %v601, %v618
    %v632 = vadd.f32 %v602, %v620
    %633 = vrot.lane.b32.xlu0 %v597, 126
    %v634 = vpop.permute.xlu0 %633
    %635 = vrot.lane.b32.xlu0 %v598, 126
    %v636 = vpop.permute.xlu0 %635
    %637 = vrot.lane.b32.xlu0 %v599, 126
    %v638 = vpop.permute.xlu0 %637
    %639 = vrot.lane.b32.xlu0 %v600, 126
    %v640 = vpop.permute.xlu0 %639
    %641 = vrot.lane.b32.xlu0 %v601, 126
    %v642 = vpop.permute.xlu0 %641
    %643 = vrot.lane.b32.xlu0 %v602, 126
    %v644 = vpop.permute.xlu0 %643
    %v651 = vadd.f32 %v627, %v634
    %v652 = vadd.f32 %v628, %v636
    %v653 = vadd.f32 %v629, %v638
    %v654 = vadd.f32 %v630, %v640
    %v655 = vadd.f32 %v631, %v642
    %v656 = vadd.f32 %v632, %v644
    %v663 = vrot.slane %v651, 1
    %v664 = vrot.slane %v652, 1
    %v665 = vsel %vm114, %v663, %v664
    %v666 = vrot.slane %v653, 1
    %v667 = vsel %vm114, %v664, %v666
    %v668 = vrot.slane %v654, 1
    %v669 = vrot.slane %v655, 1
    %v670 = vsel %vm114, %v668, %v669
    %v671 = vrot.slane %v656, 1
    %v672 = vsel %vm114, %v669, %v671
    %v679 = vadd.f32 %v651, %v665
    %v680 = vadd.f32 %v652, %v667
    %v681 = vadd.f32 %v653, %v666
    %v682 = vadd.f32 %v654, %v670
    %v683 = vadd.f32 %v655, %v672
    %v684 = vadd.f32 %v656, %v671
    %v685 = vrot.slane %v651, 2
    %v686 = vrot.slane %v652, 2
    %v687 = vsel %vm126, %v685, %v686
    %v688 = vrot.slane %v653, 2
    %v689 = vsel %vm126, %v686, %v688
    %v690 = vrot.slane %v654, 2
    %v691 = vrot.slane %v655, 2
    %v692 = vsel %vm126, %v690, %v691
    %v693 = vrot.slane %v656, 2
    %v694 = vsel %vm126, %v691, %v693
    %v701 = vadd.f32 %v679, %v687
    %v702 = vadd.f32 %v680, %v689
    %v703 = vadd.f32 %v681, %v688
    %v704 = vadd.f32 %v682, %v692
    %v705 = vadd.f32 %v683, %v694
    %v706 = vadd.f32 %v684, %v693
    %v707 = vstv %s49
    %v708 = vmul.f32 %v707, %v135
    %v709 = vmul.f32 %v707, %v136
    %v710 = vmul.f32 %v707, %v137
    %v711 = vadd.f32 %v701, %v708
    %v712 = vadd.f32 %v702, %v709
    %v713 = vadd.f32 %v703, %v710
    %v714 = vadd.f32 %v704, %v708
    %v715 = vadd.f32 %v705, %v709
    %v716 = vadd.f32 %v706, %v710
    %v717 = vmul.f32 %v711, 0.11111111
    %v718 = vmul.f32 %v712, 0.11111111
    %v719 = vmul.f32 %v713, 0.11111111
    %v720 = vmul.f32 %v714, 0.11111111
    %v721 = vmul.f32 %v715, 0.11111111
    %v722 = vmul.f32 %v716, 0.11111111
    %v723 = vmax.f32 %v717, 0.77
    %v724 = vmax.f32 %v718, 0.77
    %v725 = vmax.f32 %v719, 0.77
    %v726 = vmax.f32 %v720, 0.77
    %v727 = vmax.f32 %v721, 0.77
    %v728 = vmax.f32 %v722, 0.77
    %v729 = vmin.f32 %v723, 0.8
    %v730 = vmin.f32 %v724, 0.8
    %v731 = vmin.f32 %v725, 0.8
    %v732 = vmin.f32 %v726, 0.8
    %v733 = vmin.f32 %v727, 0.8
    %v734 = vmin.f32 %v728, 0.8
    %s735 = scalar_lea.vmem %s2, 48
    %736 = vst.msk [vmem:[%s735] sm:$0xff] %vm334, %v729
    %737 = vst.msk [vmem:[%s735 + $0x8] sm:$0xff] %vm334, %v730
    %738 = vst.msk [vmem:[%s735 + $0x10] sm:$0x3] %vm337, %v731
    %739 = vst.msk [vmem:[%s735 + $0x48] sm:$0xff] %vm334, %v732
    %740 = vst.msk [vmem:[%s735 + $0x50] sm:$0xff] %vm334, %v733
    %741 = vst.msk [vmem:[%s735 + $0x58] sm:$0x3] %vm337, %v734
    // Predicated region
    $region18: #{model_forward.1} parent=1 // pred_check
      _
    $region19: #{model_forward.1} parent=1 // pred_check_branch
      %743 = sbr.rel (0) target = $region21
    $region20: #{model_forward.1} parent=1 // pred_region
      _
    $region21: #{model_forward.1} parent=1 // pred_fallthru
      _
    // Predicated region
    $region22: #{model_forward.1} parent=1 // pred_check
      _
    $region23: #{model_forward.1} parent=1 // pred_check_branch
      %745 = sbr.rel (0) target = $region25
    $region24: #{model_forward.1} parent=1 // pred_region
      _
    $region25: #{model_forward.1} parent=1 // pred_fallthru
      _
    %746 = vsyncpa [#allocation4], 1
    %747 = vsyncpa [#allocation5], 1

</llo_original>
